<compile_context>
chip_gen: v6e
topology: v6e:2x2x1
jax: 0.10.0
libtpu: 0.0.40
codegen_flags: <defaults>
</compile_context>

<pallas_src>
import functools

import jax
import jax.numpy as jnp
from jax.experimental import pallas as pl
from jax.experimental.pallas import tpu as pltpu


# --------------------------------------------------------------------------
# generic linear:  (M, K) @ (K, N) + b  -> (M, N)   (bf16 operands, f32 accum)
# --------------------------------------------------------------------------
def _linear_kernel(x_ref, w_ref, b_ref, o_ref):
    o_ref[...] = (
        jnp.dot(x_ref[...].astype(jnp.bfloat16), w_ref[...],
                preferred_element_type=jnp.float32)
        + b_ref[...]
    )


def pallas_linear(x, w, b):
    M = x.shape[0]
    N = w.shape[1]
    return pl.pallas_call(
        _linear_kernel,
        out_shape=jax.ShapeDtypeStruct((M, N), jnp.float32),
        in_specs=[pl.BlockSpec(memory_space=pltpu.MemorySpace.VMEM)] * 3,
        out_specs=pl.BlockSpec(memory_space=pltpu.MemorySpace.VMEM),
    )(x, w, b.reshape(1, N))


# --------------------------------------------------------------------------
# mean-pool over tokens + linear, tiled over batch ("parallel" grid axis)
# (synthetic image / text "backbone" embedding step)
# --------------------------------------------------------------------------
def _meanpool_linear_kernel(x_ref, w_ref, b_ref, o_ref):
    xm = jnp.mean(x_ref[...], axis=1).astype(jnp.bfloat16)   # (bblk, F_in)
    o_ref[...] = (
        jnp.dot(xm, w_ref[...], preferred_element_type=jnp.float32) + b_ref[...]
    )


def pallas_meanpool_linear(x, w, b, *, batch_block=8):
    B, L, Fin = x.shape
    N = w.shape[1]
    bblk = batch_block if (batch_block <= B and B % batch_block == 0) else B
    return pl.pallas_call(
        _meanpool_linear_kernel,
        grid=(B // bblk,),
        in_specs=[pl.BlockSpec((bblk, L, Fin), lambda i: (i, 0, 0)),
                  pl.BlockSpec((Fin, N), lambda i: (0, 0)),
                  pl.BlockSpec((1, N), lambda i: (0, 0))],
        out_specs=pl.BlockSpec((bblk, N), lambda i: (i, 0)),
        out_shape=jax.ShapeDtypeStruct((B, N), jnp.float32),
        compiler_params=pltpu.CompilerParams(
            dimension_semantics=("parallel",)),
    )(x, w, b.reshape(1, N))


# --------------------------------------------------------------------------
# fused transformer decoder stack + classifier head.
# One pallas_call, grid = (batch blocks, layers).  The sequence lives in a
# VMEM scratch across the layer axis; per-layer weights stream as 2-D refs.
# Emits the last layer's CLS-query attention weights and the (lane-padded)
# classifier logits.
# --------------------------------------------------------------------------
def _decoder_stack_kernel(x_ref, m_ref,
                          wqkv, bqkv, wo, bo, ln1g, ln1b,
                          w1, b1, w2, b2, ln2g, ln2b,
                          cls_w, cls_b,
                          attn_ref, logits_ref,
                          seq_ref, *, n_heads):
    layer = pl.program_id(1)
    last = pl.num_programs(1) - 1

    @pl.when(layer == 0)
    def _():
        # seed the resident sequence for this batch block (output blocks are
        # write-only windows, so the seeding copy stays even with aliasing)
        seq_ref[...] = x_ref[...]

    x = seq_ref[...]                     # (bblk, S, D) f32, resident in VMEM
    bblk, S, D = x.shape
    H = n_heads
    dh = D // H
    M = bblk * S
    scale = 1.0 / float(dh) ** 0.5

    xf = x.reshape(M, D)                 # flat (bs*S, D) view -> full-M matmuls
    xb = xf.astype(jnp.bfloat16)

    # ---- fused QKV projection: one (M, D) @ (D, 3D) matmul on the 2-D ref ----
    qkv = jnp.dot(xb, wqkv[...], preferred_element_type=jnp.float32) + bqkv[...]
    q = (qkv[:, 0 * D:1 * D] * scale).astype(jnp.bfloat16).reshape(bblk, S, D)
    k = qkv[:, 1 * D:2 * D].astype(jnp.bfloat16).reshape(bblk, S, D)
    v = qkv[:, 2 * D:3 * D].astype(jnp.bfloat16).reshape(bblk, S, D)

    # additive key-padding mask (mask==1 -> attend); broadcast in the add is free
    neg = (1.0 - m_ref[...]) * (-1e9)    # (bblk, 1, S)

    # ---- attention: short static head loop (H small at this config).
    # TODO(synk): at real H (=12, dh=64) fold heads into the einsum batch dim
    # ((bs*H, S, dh) layout) instead of per-head lane slices.
    head_outs = []
    cls_rows = []
    for h in range(H):
        qh = q[:, :, h * dh:(h + 1) * dh]
        kh = k[:, :, h * dh:(h + 1) * dh]
        vh = v[:, :, h * dh:(h + 1) * dh]
        s = jnp.einsum('bqd,bkd->bqk', qh, kh,
                       preferred_element_type=jnp.float32) + neg
        s = s - jnp.max(s, axis=-1, keepdims=True)
        p = jnp.exp(s)
        denom = jnp.sum(p, axis=-1, keepdims=True)
        pn = p * pl.reciprocal(denom, approx=True)          # EUP slot
        head_outs.append(
            jnp.einsum('bqk,bkd->bqd', pn.astype(jnp.bfloat16), vh,
                       preferred_element_type=jnp.float32))
        # exact normalization for the *emitted* CLS attention probabilities
        cls_rows.append(p[:, 0:1, :] / denom[:, 0:1, :])    # (bblk, 1, S)

    ao = jnp.concatenate(head_outs, axis=-1).reshape(M, D).astype(jnp.bfloat16)

    # only the last layer's CLS attention weights are returned
    @pl.when(layer == last)
    def _():
        attn_ref[...] = jnp.concatenate(cls_rows, axis=1)   # (bblk, H, S)

    # ---- attention output projection + residual + layernorm (flat view) ----
    y1 = xf + jnp.dot(ao, wo[...], preferred_element_type=jnp.float32) + bo[...]
    mu = jnp.mean(y1, axis=-1, keepdims=True)
    var = jnp.mean((y1 - mu) ** 2, axis=-1, keepdims=True)
    y1n = (y1 - mu) * jax.lax.rsqrt(var + 1e-5) * ln1g[...] + ln1b[...]

    # ---- feed-forward block + residual + layernorm; hidden kept bf16 ----
    h1 = jnp.maximum(
        jnp.dot(y1n.astype(jnp.bfloat16), w1[...],
                preferred_element_type=jnp.float32) + b1[...],
        0.0).astype(jnp.bfloat16)
    y2 = y1n + jnp.dot(h1, w2[...], preferred_element_type=jnp.float32) + b2[...]
    mu2 = jnp.mean(y2, axis=-1, keepdims=True)
    var2 = jnp.mean((y2 - mu2) ** 2, axis=-1, keepdims=True)
    y_out = (y2 - mu2) * jax.lax.rsqrt(var2 + 1e-5) * ln2g[...] + ln2b[...]

    y3 = y_out.reshape(bblk, S, D)
    seq_ref[...] = y3

    # ---- fused classifier head on the CLS row (N padded to 128 lanes) ----
    @pl.when(layer == last)
    def _():
        cls_feat = y3[:, 0, :].astype(jnp.bfloat16)          # (bblk, D)
        logits_ref[...] = (
            jnp.dot(cls_feat, cls_w[...], preferred_element_type=jnp.float32)
            + cls_b[...])


_STACK_ORDER = ('wqkv', 'bqkv', 'wo', 'bo', 'ln1g', 'ln1b',
                'w1', 'b1', 'w2', 'b2', 'ln2g', 'ln2b')


def pallas_decoder_stack(x, key_mask, stacked, cls_w_pad, cls_b_pad, n_heads,
                         *, batch_block=None):
    bs, S, D = x.shape
    n_layers = stacked['wqkv'].shape[0]
    Ff = stacked['w1'].shape[-1]
    H = n_heads
    n_pad = cls_w_pad.shape[1]

    bblk = batch_block if (batch_block and bs % batch_block == 0) else bs
    nb = bs // bblk

    mask3 = key_mask.reshape(bs, 1, S).astype(jnp.float32)
    weights = [stacked[kk] for kk in _STACK_ORDER]
    # pl.Squeezed() leading layer dim -> kernel sees 2-D weight refs (MXU layout)
    w_specs = [pl.BlockSpec((pl.Squeezed(),) + tuple(w.shape[1:]),
                            lambda b, l: (l, 0, 0)) for w in weights]
    head_specs = [pl.BlockSpec(tuple(cls_w_pad.shape), lambda b, l: (0, 0)),
                  pl.BlockSpec(tuple(cls_b_pad.shape), lambda b, l: (0, 0))]

    # explicit VMEM budget: double-buffered per-layer weights + resident seq +
    # transient activations, with margin; clamped to v7x's 64 MiB physical.
    per_layer_w = sum((w.size // w.shape[0]) * w.dtype.itemsize for w in weights)
    head_w = (cls_w_pad.size * cls_w_pad.dtype.itemsize
              + cls_b_pad.size * cls_b_pad.dtype.itemsize)
    act = (4 * bblk * S * (2 * D + 3 * D + Ff)
           + 4 * bblk * H * S * (S + D)
           + 4 * bblk * (H * S + n_pad))
    est = 2 * per_layer_w + head_w + 4 * bblk * S * D * 4 + 4 * act
    vmem_limit = int(min(max(est, 8 << 20), 64 << 20))
    # TODO(synk): at real sizes (D=768, F=3072) on v7x (64 MiB VMEM), split each
    # layer into attention / FFN grid sub-steps or tile w1/w2 over the F axis.
    # TODO(synk): at real sizes the layer loop is weight-streaming bound — use
    # int8 weights on v5e/v6e, fp8 (e4m3) on v7x.

    kernel = functools.partial(_decoder_stack_kernel, n_heads=n_heads)
    attn, logits = pl.pallas_call(
        kernel,
        grid=(nb, n_layers),          # batch blocks (parallel) x layers (seq.)
        in_specs=[pl.BlockSpec((bblk, S, D), lambda b, l: (b, 0, 0)),
                  pl.BlockSpec((bblk, 1, S), lambda b, l: (b, 0, 0))]
                 + w_specs + head_specs,
        out_specs=[pl.BlockSpec((bblk, H, S), lambda b, l: (b, 0, 0)),
                   pl.BlockSpec((bblk, n_pad), lambda b, l: (b, 0))],
        out_shape=[jax.ShapeDtypeStruct((bs, H, S), jnp.float32),
                   jax.ShapeDtypeStruct((bs, n_pad), jnp.float32)],
        scratch_shapes=[pltpu.VMEM((bblk, S, D), jnp.float32)],
        compiler_params=pltpu.CompilerParams(
            dimension_semantics=("parallel", "arbitrary"),
            vmem_limit_bytes=vmem_limit),
    )(x, mask3, *weights, cls_w_pad, cls_b_pad)
    return logits, attn


# --------------------------------------------------------------------------
# parameters (deterministic synthetic init — no checkpoint loading)
# matmul weights in bf16; biases / layernorm params in f32.
# --------------------------------------------------------------------------
def init_params(key, *, feat, d_model, n_heads, n_layers, ffn, out_size,
                patch_dim, vocab, seq_len):
    keys = iter(jax.random.split(key, 64))

    def nrm(shape, s=0.02):
        return jax.random.normal(next(keys), shape, jnp.float32) * s

    def nrm_bf16(shape, s=0.02):
        return nrm(shape, s).astype(jnp.bfloat16)

    p = {}
    # synthetic image backbone (patch-embed)
    p['img_w'] = nrm_bf16((patch_dim, feat))
    p['img_b'] = jnp.zeros((feat,), jnp.float32)
    # synthetic text backbone (token table + projection)
    p['tok_table'] = nrm((vocab, feat))
    p['txt_w'] = nrm_bf16((feat, feat))
    p['txt_b'] = jnp.zeros((feat,), jnp.float32)
    # decoder input projection, CLS token, positional encoding
    p['proj_w'] = nrm_bf16((feat, d_model))
    p['proj_b'] = jnp.zeros((d_model,), jnp.float32)
    p['cls_token'] = nrm((1, 1, d_model))
    p['pos_emb'] = nrm((seq_len, d_model))
    # transformer encoder layers, stacked with a leading n_layers axis
    L, D, F = n_layers, d_model, ffn
    p['decoder'] = {
        'wqkv': nrm_bf16((L, D, 3 * D)),              # fused Q/K/V weight
        'bqkv': jnp.zeros((L, 1, 3 * D), jnp.float32),
        'wo':   nrm_bf16((L, D, D)),
        'bo':   jnp.zeros((L, 1, D), jnp.float32),
        'ln1g': jnp.ones((L, 1, D), jnp.float32),
        'ln1b': jnp.zeros((L, 1, D), jnp.float32),
        'w1':   nrm_bf16((L, D, F)),
        'b1':   jnp.zeros((L, 1, F), jnp.float32),
        'w2':   nrm_bf16((L, F, D)),
        'b2':   jnp.zeros((L, 1, D), jnp.float32),
        'ln2g': jnp.ones((L, 1, D), jnp.float32),
        'ln2b': jnp.zeros((L, 1, D), jnp.float32),
    }
    # final classifier, N padded to a lane-dense 128 multiple (sliced outside)
    n_pad = max(128, ((out_size + 127) // 128) * 128)
    cls_w = nrm((d_model, out_size)).astype(jnp.bfloat16)
    p['cls_w_pad'] = jnp.zeros((d_model, n_pad), jnp.bfloat16).at[:, :out_size].set(cls_w)
    p['cls_b_pad'] = jnp.zeros((1, n_pad), jnp.float32)
    p['out_size'] = out_size
    return p


# --------------------------------------------------------------------------
# forward (non-time-series branches of mm_model_early.forward)
# --------------------------------------------------------------------------
def mm_model_early_forward(x_img, x_text_ids, params, *, patch, n_heads):
    bs, C, H, W = x_img.shape

    # ---- image backbone (synthetic stand-in for pretrained ViT-B/16) ----
    # TODO(synk): pretrained timm ViT replaced by patch-embed + mean-pool kernel.
    xp = x_img.reshape(bs, C, H // patch, patch, W // patch, patch)
    xp = xp.transpose(0, 2, 4, 1, 3, 5).reshape(
        bs, (H // patch) * (W // patch), C * patch * patch)
    img_emb = pallas_meanpool_linear(xp, params['img_w'], params['img_b'])

    # ---- text backbone (synthetic stand-in for BiomedCLIP text transformer) ----
    # TODO(synk): pretrained PubMedBERT replaced by token-embed + mean-pool kernel.
    tok = params['tok_table'][x_text_ids]
    txt_emb = pallas_meanpool_linear(tok, params['txt_w'], params['txt_b'])

    # ---- padding masks (non-time-series branch semantics: True == valid) ----
    padding_masks_img = jnp.ones((bs, 2), dtype=jnp.bool_)    # [CLS, img token]
    padding_masks_text = jnp.ones((bs, 1), dtype=jnp.bool_)   # [text token]

    # ---- early-fusion transformer decoder ----
    d_model = params['proj_w'].shape[1]
    # fused projection of both modality embeddings in one matmul call
    both = jnp.concatenate([img_emb, txt_emb], axis=0)                   # (2*bs, feat)
    both_tok = pallas_linear(both, params['proj_w'], params['proj_b'])   # (2*bs, D)
    img_tok, txt_tok = both_tok[:bs], both_tok[bs:]

    cls = jnp.broadcast_to(params['cls_token'], (bs, 1, d_model))
    seq = jnp.concatenate([cls, img_tok[:, None, :], txt_tok[:, None, :]], axis=1)
    seq = seq + params['pos_emb'][None, :, :]
    # NOTE: mask polarity is True == attend (inverse of torch key_padding_mask)
    key_mask = jnp.concatenate([padding_masks_img, padding_masks_text], axis=1)

    # split batch into >=2 blocks so v7x's two TensorCores can both work
    batch_block = bs // 2 if (bs >= 2 and bs % 2 == 0) else bs
    logits_pad, cls_weight_scores = pallas_decoder_stack(
        seq, key_mask, params['decoder'], params['cls_w_pad'],
        params['cls_b_pad'], n_heads, batch_block=batch_block)
    logits = logits_pad[:, :params['out_size']]

    return {
        'out': logits,
        'weight_scores': cls_weight_scores,   # per-head CLS attention, last layer
        'padding_masks_img': padding_masks_img,
        'padding_masks_text': padding_masks_text,
    }


# --------------------------------------------------------------------------
if __name__ == "__main__":
    bs = 2
    C, HW, patch = 3, 16, 8            # 4 patches of dim 192
    feat = 32                          # stands in for feat_dim = 768
    d_model = 32                       # d_model == feat_dim (classifier input)
    n_heads = 4
    n_layers = 2                       # args.decoder_layers
    ffn = 4 * d_model
    out_size = 5
    vocab, text_len = 64, 8
    seq_len = 3                        # [CLS, img token, text token]

    key = jax.random.PRNGKey(0)
    k_img, k_txt, k_par = jax.random.split(key, 3)

    x_img = jax.random.normal(k_img, (bs, C, HW, HW), jnp.float32)   # NCHW
    x_text = jax.random.randint(k_txt, (bs, text_len), 0, vocab)     # token ids

    params = init_params(
        k_par, feat=feat, d_model=d_model, n_heads=n_heads, n_layers=n_layers,
        ffn=ffn, out_size=out_size, patch_dim=C * patch * patch, vocab=vocab,
        seq_len=seq_len)

    out = mm_model_early_forward(x_img, x_text, params, patch=patch,
                                 n_heads=n_heads)
    jax.block_until_ready(out['out'])
    jax.block_until_ready(out['weight_scores'])

    assert out['out'].shape == (bs, out_size)
    assert out['weight_scores'].shape == (bs, n_heads, seq_len)
    assert out['padding_masks_img'].shape == (bs, 2)
    assert out['padding_masks_text'].shape == (bs, 1)
    print("KERNEL_OK")
</pallas_src>

<mosaic_0001>
module attributes {stable_mosaic.version = 11 : i64} {
  func.func @_meanpool_linear_kernel(%arg0: i32, %arg1: memref<2x4x192xf32, #tpu.memory_space<vmem>>, %arg2: memref<192x32xbf16, #tpu.memory_space<vmem>>, %arg3: memref<1x32xf32, #tpu.memory_space<vmem>>, %arg4: memref<2x32xf32, #tpu.memory_space<vmem>>) attributes {dimension_semantics = [#tpu.dimension_semantics<parallel>], iteration_bounds = array<i64: 1>, scalar_prefetch = 0 : i64, scratch_operands = 0 : i64, tpu.core_type = #tpu.core_type<tc>, window_params = [{transform_indices = @transform_0, window_bounds = array<i64: 2, 4, 192>}, {pipeline_mode = #tpu.pipeline_mode<synchronous>, transform_indices = @transform_1, window_bounds = array<i64: 192, 32>}, {pipeline_mode = #tpu.pipeline_mode<synchronous>, transform_indices = @transform_2, window_bounds = array<i64: 1, 32>}, {transform_indices = @transform_3, window_bounds = array<i64: 2, 32>}]} {
    %c0 = arith.constant 0 : index
    %c0_0 = arith.constant 0 : index
    %c0_1 = arith.constant 0 : index
    %0 = vector.load %arg1[%c0, %c0_0, %c0_1] : memref<2x4x192xf32, #tpu.memory_space<vmem>>, vector<2x4x192xf32>
    %cst = arith.constant dense<0.000000e+00> : vector<2x192xf32>
    %1 = vector.multi_reduction <add>, %0, %cst [1] : vector<2x4x192xf32> to vector<2x192xf32>
    %cst_2 = arith.constant 4.000000e+00 : f32
    %2 = vector.broadcast %cst_2 : f32 to vector<2x192xf32>
    %3 = arith.divf %1, %2 : vector<2x192xf32>
    %4 = arith.truncf %3 : vector<2x192xf32> to vector<2x192xbf16>
    %c0_3 = arith.constant 0 : index
    %c0_4 = arith.constant 0 : index
    %5 = vector.load %arg2[%c0_3, %c0_4] : memref<192x32xbf16, #tpu.memory_space<vmem>>, vector<192x32xbf16>
    %cst_5 = arith.constant dense<0.000000e+00> : vector<2x32xf32>
    %6 = tpu.matmul %4, %5, %cst_5 {dimension_numbers = #tpu.dot_dimension_numbers<[1], [0], [0], [1], [0, 0, 1, 1], [], []>} : vector<2x192xbf16>, vector<192x32xbf16>, vector<2x32xf32> -> vector<2x32xf32>
    %c0_6 = arith.constant 0 : index
    %c0_7 = arith.constant 0 : index
    %7 = vector.load %arg3[%c0_6, %c0_7] : memref<1x32xf32, #tpu.memory_space<vmem>>, vector<1x32xf32>
    %8 = vector.broadcast %7 : vector<1x32xf32> to vector<2x32xf32>
    %9 = arith.addf %6, %8 : vector<2x32xf32>
    %c0_8 = arith.constant 0 : index
    %c0_9 = arith.constant 0 : index
    %10 = vector.load %arg4[%c0_8, %c0_9] : memref<2x32xf32, #tpu.memory_space<vmem>>, vector<2x32xf32>
    tpu.vector_store %arg4[%c0_8, %c0_9], %9 {strides = array<i32>} : memref<2x32xf32, #tpu.memory_space<vmem>>, vector<2x32xf32>,
    return
  }
  func.func @transform_0(%arg0: i32) -> (i32, i32, i32) {
    %c0_i32 = arith.constant 0 : i32
    %c0_i32_0 = arith.constant 0 : i32
    %c0_i32_1 = arith.constant 0 : i32
    return %arg0, %c0_i32, %c0_i32_0 : i32, i32, i32
  }
  func.func @transform_1(%arg0: i32) -> (i32, i32) {
    %c0_i32 = arith.constant 0 : i32
    %c0_i32_0 = arith.constant 0 : i32
    %c0_i32_1 = arith.constant 0 : i32
    return %c0_i32, %c0_i32_0 : i32, i32
  }
  func.func @transform_2(%arg0: i32) -> (i32, i32) {
    %c0_i32 = arith.constant 0 : i32
    %c0_i32_0 = arith.constant 0 : i32
    %c0_i32_1 = arith.constant 0 : i32
    return %c0_i32, %c0_i32_0 : i32, i32
  }
  func.func @transform_3(%arg0: i32) -> (i32, i32) {
    %c0_i32 = arith.constant 0 : i32
    %c0_i32_0 = arith.constant 0 : i32
    return %arg0, %c0_i32 : i32, i32
  }
}

</mosaic_0001>

<llo_original>
// kernel: tpu_custom_call.1
$region0: #{tpu_custom_call.1}
  #allocation0 [shape = 'u32[]', space=smem, size = 0x4, offset = 0x4, fixed_abs, tag = 'smem constant byte address 0x4 - core index']
  #allocation1 [shape = 'u32[144,128]{1,0:T(1,128)}', space=vmem, size = 0x12000, scoped, tag = 'internal scratch']
  %s0 = inlined_call_operand.vmem [shape: f32[2,4,192], index: 0, kind: input, shape index: {}]
  %s1 = inlined_call_operand.vmem [shape: bf16[192,32], index: 1, kind: input, shape index: {}]
  %s2 = inlined_call_operand.vmem [shape: f32[1,32], index: 2, kind: input, shape index: {}]
  %s3 = inlined_call_operand.hbm [shape: f32[2,32], index: 3, kind: output, shape index: {}]
  %s4 = sld [smem:[#allocation0]]
  $region22: #{tpu_custom_call.1} parent=0
    _
  %s6 = ssub.s32 1, %s4
  %s7 = scalar_select 0, %s6, %s4
  $region1: #{tpu_custom_call.1} parent=0
    #allocation2 [shape = 'u8[1024]{0}', space=vmem, size = 0x400, scoped, tag = 'output window, operand 0, single buffered']
    #allocation3 [shape = 's32[1]{0}', space=sflag, size = 0x4, scoped, tag = 'scoped memory for tpu_custom_call.1']
    %8 = vsyncpa [#allocation3], 0
    // Predicated region
    $region2: #{tpu_custom_call.1} parent=1 // pred_check
      _
    $region3: #{tpu_custom_call.1} parent=1 // pred_check_branch
      %10 = sbr.rel (0) target = $region5
    $region4: #{tpu_custom_call.1} parent=1 // pred_region
      _
    $region5: #{tpu_custom_call.1} parent=1 // pred_fallthru
      _
    // Predicated region
    $region6: #{tpu_custom_call.1} parent=1 // pred_check
      _
    $region7: #{tpu_custom_call.1} parent=1 // pred_check_branch
      %12 = sbr.rel (0) target = $region9
    $region8: #{tpu_custom_call.1} parent=1 // pred_region
      _
    $region9: #{tpu_custom_call.1} parent=1 // pred_fallthru
      _
    // Predicated region
    $region10: #{tpu_custom_call.1} parent=1 // pred_check
      _
    $region11: #{tpu_custom_call.1} parent=1 // pred_check_branch
      %14 = sbr.rel (0) target = $region13
    $region12: #{tpu_custom_call.1} parent=1 // pred_region
      _
    $region13: #{tpu_custom_call.1} parent=1 // pred_fallthru
      _
    %v16 = vld [vmem:[%s0] sm:$0xff]
    %v17 = vld [vmem:[%s0 + $0x8] sm:$0xff]
    %v20 = vcombine.high %v16, %v16
    %v21 = vcombine.high %v17, %v17
    %vm24 = vcmask 1043456
    %v25 = vsel %vm24, %v16, 0.0
    %v26 = vrot.slane %v25, 4
    %v27 = vadd.f32 %v25, %v26
    %v28 = vrot.slane %v27, 2
    %v29 = vadd.f32 %v27, %v28
    %v30 = vrot.slane %v29, 1
    %v31 = vadd.f32 %v29, %v30
    %vm32 = vcmask 519168
    %v33 = vsel %vm32, %v20, 0.0
    %v34 = vrot.slane %v33, 4
    %v35 = vadd.f32 %v33, %v34
    %v36 = vrot.slane %v35, 2
    %v37 = vadd.f32 %v35, %v36
    %v38 = vrot.slane %v37, 1
    %v39 = vadd.f32 %v37, %v38
    %v40 = vsel %vm24, %v17, 0.0
    %v41 = vrot.slane %v40, 4
    %v42 = vadd.f32 %v40, %v41
    %v43 = vrot.slane %v42, 2
    %v44 = vadd.f32 %v42, %v43
    %v45 = vrot.slane %v44, 1
    %v46 = vadd.f32 %v44, %v45
    %v47 = vsel %vm32, %v21, 0.0
    %v48 = vrot.slane %v47, 4
    %v49 = vadd.f32 %v47, %v48
    %v50 = vrot.slane %v49, 2
    %v51 = vadd.f32 %v49, %v50
    %v52 = vrot.slane %v51, 1
    %v53 = vadd.f32 %v51, %v52
    %v54 = vrcp.pop 4.0
    %v55 = vmul.f32 %v31, %v54
    %v56 = vmul.f32 %v39, %v54
    %v57 = vmul.f32 %v46, %v54
    %v58 = vmul.f32 %v53, %v54
    %v59 = vpack.c.bf16 %v55, %v55
    %v60 = vpack.c.bf16 %v56, %v56
    %v61 = vpack.c.bf16 %v57, %v57
    %v62 = vpack.c.bf16 %v58, %v58
    %v63 = vld [vmem:[%s1] sm:$0xf]
    %v64 = vld [vmem:[%s1 + $0x4] sm:$0xf]
    %v65 = vld [vmem:[%s1 + $0x8] sm:$0xf]
    %v66 = vld [vmem:[%s1 + $0xc] sm:$0xf]
    %v67 = vld [vmem:[%s1 + $0x10] sm:$0xf]
    %v68 = vld [vmem:[%s1 + $0x14] sm:$0xf]
    %v69 = vld [vmem:[%s1 + $0x18] sm:$0xf]
    %v70 = vld [vmem:[%s1 + $0x1c] sm:$0xf]
    %v71 = vld [vmem:[%s1 + $0x20] sm:$0xf]
    %v72 = vld [vmem:[%s1 + $0x24] sm:$0xf]
    %v73 = vld [vmem:[%s1 + $0x28] sm:$0xf]
    %v74 = vld [vmem:[%s1 + $0x2c] sm:$0xf]
    %v75 = vld [vmem:[%s1 + $0x30] sm:$0xf]
    %v76 = vld [vmem:[%s1 + $0x34] sm:$0xf]
    %v77 = vld [vmem:[%s1 + $0x38] sm:$0xf]
    %v78 = vld [vmem:[%s1 + $0x3c] sm:$0xf]
    %v79 = vld [vmem:[%s1 + $0x40] sm:$0xf]
    %v80 = vld [vmem:[%s1 + $0x44] sm:$0xf]
    %v81 = vld [vmem:[%s1 + $0x48] sm:$0xf]
    %v82 = vld [vmem:[%s1 + $0x4c] sm:$0xf]
    %v83 = vld [vmem:[%s1 + $0x50] sm:$0xf]
    %v84 = vld [vmem:[%s1 + $0x54] sm:$0xf]
    %v85 = vld [vmem:[%s1 + $0x58] sm:$0xf]
    %v86 = vld [vmem:[%s1 + $0x5c] sm:$0xf]
    %v87 = vld [vmem:[%s2] sm:$0x1]
    %v89 = vlaneseq
    %v90 = vshrl.u32 %v89, 7
    %v91 = vsub.s32 0, %v90
    %v92 = vrot.slane %v87, %v91
    %v98 = vunpack.c.l.b16 %v59
    %v99 = vunpack.c.l.b16 %v60
    %v100 = vunpack.c.l.b16 %v61
    %v101 = vunpack.c.l.b16 %v62
    %vm102 = vcmask 1041409
    %v103 = vsel %vm102, %v100, %v98
    %v104 = vsel %vm102, %v101, %v99
    %v105 = vpack.c.b16 %v103, %v103
    %v106 = vpack.c.b16 %v104, %v104
    %v132 = vunpack.c.l.b16 %v63
    %v133 = vunpack.c.l.b16 %v64
    %v134 = vunpack.c.l.b16 %v65
    %v135 = vunpack.c.l.b16 %v66
    %v136 = vunpack.c.l.b16 %v67
    %v137 = vunpack.c.l.b16 %v68
    %v138 = vunpack.c.l.b16 %v69
    %v139 = vunpack.c.l.b16 %v70
    %v140 = vunpack.c.l.b16 %v71
    %v141 = vunpack.c.l.b16 %v72
    %v142 = vunpack.c.l.b16 %v73
    %v143 = vunpack.c.l.b16 %v74
    %v144 = vunpack.c.l.b16 %v75
    %v145 = vunpack.c.l.b16 %v76
    %v146 = vunpack.c.l.b16 %v77
    %v147 = vunpack.c.l.b16 %v78
    %v148 = vunpack.c.l.b16 %v79
    %v149 = vunpack.c.l.b16 %v80
    %v150 = vunpack.c.l.b16 %v81
    %v151 = vunpack.c.l.b16 %v82
    %v152 = vunpack.c.l.b16 %v83
    %v153 = vunpack.c.l.b16 %v84
    %v154 = vunpack.c.l.b16 %v85
    %v155 = vunpack.c.l.b16 %v86
    %v156 = vpack.c.b16 %v133, %v132
    %v157 = vpack.c.b16 %v135, %v134
    %v158 = vpack.c.b16 %v137, %v136
    %v159 = vpack.c.b16 %v139, %v138
    %v160 = vpack.c.b16 %v141, %v140
    %v161 = vpack.c.b16 %v143, %v142
    %v162 = vpack.c.b16 %v145, %v144
    %v163 = vpack.c.b16 %v147, %v146
    %v164 = vpack.c.b16 %v149, %v148
    %v165 = vpack.c.b16 %v151, %v150
    %v166 = vpack.c.b16 %v153, %v152
    %v167 = vpack.c.b16 %v155, %v154
    %vm180 = vcmask 523264
    %v182 = vsel %vm180, %v106, 0
    %184 = vmatprep.subr.bf16.mxu0 0
    %185 = vmatpush1.bf16.msra.mxu0 %v163
    %186 = vmatprep.subr.bf16.mxu0 0
    %187 = vmatpush1.bf16.msra.mxu0 %v162
    %188 = vmatprep.subr.bf16.mxu0 0
    %189 = vmatpush1.bf16.msra.mxu0 %v161
    %190 = vmatprep.subr.bf16.mxu0 0
    %191 = vmatpush1.bf16.msra.mxu0 %v160
    %192 = vmatprep.subr.bf16.mxu0 0
    %193 = vmatpush1.bf16.msra.mxu0 %v159
    %194 = vmatprep.subr.bf16.mxu0 0
    %195 = vmatpush1.bf16.msra.mxu0 %v158
    %196 = vmatprep.subr.bf16.mxu0 0
    %197 = vmatpush1.bf16.msra.mxu0 %v157
    %198 = vmatprep.subr.bf16.mxu0 0
    %199 = vmatpush1.bf16.msra.mxu0 %v156
    %200 = vmatprep.subr.bf16.mxu0 0
    %201 = vmatpush2.bf16.msra.mxu0 0
    %202 = vmatprep.subr.bf16.mxu0 0
    %203 = vmatpush2.bf16.msra.mxu0 0
    %204 = vmatprep.subr.bf16.mxu0 0
    %205 = vmatpush2.bf16.msra.mxu0 0
    %206 = vmatprep.subr.bf16.mxu0 0
    %207 = vmatpush2.bf16.msra.mxu0 0
    %208 = vmatprep.subr.bf16.mxu0 0
    %209 = vmatpush2.bf16.msra.mxu0 %v167
    %210 = vmatprep.subr.bf16.mxu0 0
    %211 = vmatpush2.bf16.msra.mxu0 %v166
    %212 = vmatprep.subr.bf16.mxu0 0
    %213 = vmatpush2.bf16.msra.mxu0 %v165
    %214 = vmatprep.subr.bf16.mxu0 0
    %215 = vmatpush2.bf16.msra.mxu0 %v164
    %216 = vmatprep.mubr.bf16.mxu0 %v182
    %217 = vmatmul.mubr.bf16.gmra.mxu0 %v105
    %v218 = vpop.f32.mrf.mxu0
    %v219 = vadd.f32 %v92, %v218
    %v220 = vpop.f32.mrf.mxu0
    %v221 = vpop.f32.mrf.mxu0
    %v222 = vpop.f32.mrf.mxu0
    %223 = vdwg.mxu0
    %vm224 = vcmask 254976
    %225 = vst.msk [vmem:[#allocation2] sm:$0x3] %vm224, %v219
    // Predicated region
    $region14: #{tpu_custom_call.1} parent=1 // pred_check
      _
    $region15: #{tpu_custom_call.1} parent=1 // pred_check_branch
      %227 = sbr.rel (0) target = $region17
    $region16: #{tpu_custom_call.1} parent=1 // pred_region
      %s229 = ssub.s32 32, 32
      %230 = vsyncadd [#allocation3], %s229
      %s232 = sshll.u32 [#allocation2], 4
      %s233 = int_to_ptr.vmem [resolvable:$true] %s232
      %235 = dma.vmem_to_hbm [thread:$0]  %s233, 32, %s3, [#allocation3]
    $region17: #{tpu_custom_call.1} parent=1 // pred_fallthru
      _
    // Predicated region
    $region18: #{tpu_custom_call.1} parent=1 // pred_check
      _
    $region19: #{tpu_custom_call.1} parent=1 // pred_check_branch
      %237 = sbr.rel (0) target = $region21
    $region20: #{tpu_custom_call.1} parent=1 // pred_region
      %238 = dma.done [#allocation3], 32
    $region21: #{tpu_custom_call.1} parent=1 // pred_fallthru
      _
    %239 = vsyncpa [#allocation3], 1

</llo_original>
